<compile_context>
chip_gen: v7x
topology: tpu7x:2x2x1
jax: 0.10.0
libtpu: 0.0.40
codegen_flags: <defaults>
</compile_context>

<pallas_src>
import functools
import math

import jax
import jax.numpy as jnp
from jax.experimental import pallas as pl
from jax.experimental.pallas import tpu as pltpu


def _to_pair(v):
    return v if isinstance(v, tuple) else (v, v)


def get_pad_shape(input_shape, kernel_size, stride, dilation):
    """Same math as AdaptivePadding.get_pad_shape (all static Python ints)."""
    input_h, input_w = input_shape
    kernel_h, kernel_w = kernel_size
    stride_h, stride_w = stride
    dil_h, dil_w = dilation
    output_h = math.ceil(input_h / stride_h)
    output_w = math.ceil(input_w / stride_w)
    pad_h = max((output_h - 1) * stride_h + (kernel_h - 1) * dil_h + 1 - input_h, 0)
    pad_w = max((output_w - 1) * stride_w + (kernel_w - 1) * dil_w + 1 - input_w, 0)
    return pad_h, pad_w


# ---------------------------------------------------------------------------
# kernels
# ---------------------------------------------------------------------------

def _pad_plane_kernel(x_ref, o_ref, *, pad_top, pad_bottom, pad_left, pad_right):
    """General pad: x_ref (bc, h, w) -> o_ref (bc, h+pad_h, w+pad_w).

    Interior copy + (up to) four zero border strips.  Every output element is
    written exactly once — no concatenate temp, no zero-fill-then-overwrite.
    """
    bc, _, w_out = o_ref.shape
    h, w = x_ref.shape[1], x_ref.shape[2]
    dt = o_ref.dtype
    # interior
    o_ref[:, pl.ds(pad_top, h), pl.ds(pad_left, w)] = x_ref[...]
    # top / bottom strips (full output width, covers the corners)
    if pad_top:
        o_ref[:, pl.ds(0, pad_top), :] = jnp.zeros((bc, pad_top, w_out), dt)
    if pad_bottom:
        o_ref[:, pl.ds(pad_top + h, pad_bottom), :] = jnp.zeros((bc, pad_bottom, w_out), dt)
    # left / right strips (interior rows only)
    if pad_left:
        o_ref[:, pl.ds(pad_top, h), pl.ds(0, pad_left)] = jnp.zeros((bc, h, pad_left), dt)
    if pad_right:
        o_ref[:, pl.ds(pad_top, h), pl.ds(pad_left + w, pad_right)] = jnp.zeros((bc, h, pad_right), dt)


def _pad_flat_kernel(x_ref, o_ref, *, offset):
    """Lane-dense path for pad_w == 0 on flattened rows.

    x_ref: (bc, h*w), o_ref: (bc, h_out*w).  The interior is a contiguous run
    starting at `offset = pad_top*w`; zeros before/after it.
    """
    bc, n_out = o_ref.shape
    n_in = x_ref.shape[1]
    dt = o_ref.dtype
    o_ref[:, pl.ds(offset, n_in)] = x_ref[...]
    if offset:
        o_ref[:, pl.ds(0, offset)] = jnp.zeros((bc, offset), dt)
    tail = n_out - offset - n_in
    if tail:
        o_ref[:, pl.ds(offset + n_in, tail)] = jnp.zeros((bc, tail), dt)


# ---------------------------------------------------------------------------
# tiling helpers
# ---------------------------------------------------------------------------

def _vmem_capacity_bytes():
    """Per-core VMEM capacity; conservative 64 MiB if the query fails."""
    try:
        cap = int(pltpu.get_tpu_info().vmem_capacity_bytes)
        if 8 * 1024 * 1024 <= cap <= 1024 * 1024 * 1024:
            return cap
    except Exception:
        pass
    return 64 * 1024 * 1024


def _divisors_desc(n):
    return [d for d in range(n, 0, -1) if n % d == 0]


def _pick_bc_block(bc, per_bc_bytes, budget_bytes, prefer_split):
    """Largest divisor of `bc` whose (in+out) tile fits the budget."""
    for d in _divisors_desc(bc):
        if prefer_split and d == bc and bc > 1:
            continue  # keep >=2 grid steps so both v7x TensorCores get work
        if d * per_bc_bytes <= budget_bytes:
            return d
    return None


def _pick_bc_block_flat(bc, per_bc_bytes, budget_bytes):
    """As above, but bc_blk is the 2nd-to-last block dim in the flat path: it
    must be a multiple of 8 or the full extent (TPU (8,128) block rule)."""
    for d in _divisors_desc(bc):
        if (d == bc or d % 8 == 0) and d * per_bc_bytes <= budget_bytes:
            return d
    return None


# ---------------------------------------------------------------------------
# wrapper
# ---------------------------------------------------------------------------

def adaptive_padding(x, kernel_size=1, stride=1, dilation=1, padding="corner",
                     tile_budget_bytes=None):
    """Functional equivalent of AdaptivePadding.forward for NCHW input `x`."""
    assert padding in ("same", "corner")
    kernel_size = _to_pair(kernel_size)
    stride = _to_pair(stride)
    dilation = _to_pair(dilation)

    b, c, h, w = x.shape
    pad_h, pad_w = get_pad_shape((h, w), kernel_size, stride, dilation)
    if pad_h == 0 and pad_w == 0:
        return x

    if padding == "corner":
        pad_top, pad_left = 0, 0
    else:  # "same"
        pad_top, pad_left = pad_h // 2, pad_w // 2
    pad_bottom, pad_right = pad_h - pad_top, pad_w - pad_left
    h_out, w_out = h + pad_h, w + pad_w

    itemsize = jnp.dtype(x.dtype).itemsize
    bc = b * c

    # Per-generation VMEM sizing: tile (in+out) <= cap/4 so the double-buffered
    # working set stays around cap/2 (v7x: ~16 MiB tiles / 64 MiB VMEM;
    # v5e/v6e: ~32 MiB tiles / 128 MiB VMEM).
    vmem_cap = _vmem_capacity_bytes()
    if tile_budget_bytes is None:
        tile_budget_bytes = vmem_cap // 4
    vmem_limit = min((vmem_cap * 3) // 4, 128 * 1024 * 1024)
    is_v7x_like = vmem_cap <= 64 * 1024 * 1024  # 2 TCs share the grid

    compiler_params = pltpu.CompilerParams(
        dimension_semantics=("parallel",),
        vmem_limit_bytes=vmem_limit,
    )
    cost = pl.CostEstimate(
        flops=0, transcendentals=0,
        bytes_accessed=(bc * h * w + bc * h_out * w_out) * itemsize,
    )

    # ---- lane-dense fast path: only H needs padding --------------------------
    if pad_w == 0:
        n_in, n_out = h * w, h_out * w
        per_bc = (n_in + n_out) * itemsize
        bc_blk = _pick_bc_block_flat(bc, per_bc, tile_budget_bytes)
        if bc_blk is not None:
            kernel = functools.partial(_pad_flat_kernel, offset=pad_top * w)
            out = pl.pallas_call(
                kernel,
                out_shape=jax.ShapeDtypeStruct((bc, n_out), x.dtype),
                grid_spec=pl.GridSpec(
                    grid=(bc // bc_blk,),
                    in_specs=[pl.BlockSpec((bc_blk, n_in), lambda i: (i, 0))],
                    out_specs=pl.BlockSpec((bc_blk, n_out), lambda i: (i, 0)),
                ),
                compiler_params=compiler_params,
                cost_estimate=cost,
            )(x.reshape(bc, n_in))
            return out.reshape(b, c, h_out, w_out)

    # ---- general path: whole (H, W) planes, (B*C) axis tiled -----------------
    per_bc = (h * w + h_out * w_out) * itemsize
    bc_blk = _pick_bc_block(bc, per_bc, tile_budget_bytes, prefer_split=is_v7x_like)
    if bc_blk is None:
        # TODO(synk): add an H-tiled Pallas path for planes exceeding the VMEM budget; defer to XLA pad (still pure-bandwidth) until then.
        pads = ((0, 0), (0, 0), (pad_top, pad_bottom), (pad_left, pad_right))
        return jnp.pad(x, pads)

    kernel = functools.partial(
        _pad_plane_kernel,
        pad_top=pad_top, pad_bottom=pad_bottom,
        pad_left=pad_left, pad_right=pad_right,
    )
    out = pl.pallas_call(
        kernel,
        out_shape=jax.ShapeDtypeStruct((bc, h_out, w_out), x.dtype),
        grid_spec=pl.GridSpec(
            grid=(bc // bc_blk,),
            in_specs=[pl.BlockSpec((bc_blk, h, w), lambda i: (i, 0, 0))],
            out_specs=pl.BlockSpec((bc_blk, h_out, w_out), lambda i: (i, 0, 0)),
        ),
        compiler_params=compiler_params,
        cost_estimate=cost,
    )(x.reshape(bc, h, w))
    return out.reshape(b, c, h_out, w_out)


# ---------------------------------------------------------------------------
# reference + tests
# ---------------------------------------------------------------------------

def _reference(x, kernel_size, stride, dilation, padding):
    """Pure-JAX reference (mirrors torch F.pad semantics of the module)."""
    kernel_size = _to_pair(kernel_size)
    stride = _to_pair(stride)
    dilation = _to_pair(dilation)
    h, w = x.shape[-2:]
    pad_h, pad_w = get_pad_shape((h, w), kernel_size, stride, dilation)
    if pad_h == 0 and pad_w == 0:
        return x
    if padding == "corner":
        pads = ((0, 0), (0, 0), (0, pad_h), (0, pad_w))
    else:
        pads = ((0, 0), (0, 0), (pad_h // 2, pad_h - pad_h // 2),
                (pad_w // 2, pad_w - pad_w // 2))
    return jnp.pad(x, pads)


if __name__ == "__main__":
    ok = True

    def check(x, ks, st, dl, mode, expect_shape, **kw):
        out = jax.block_until_ready(
            adaptive_padding(x, kernel_size=ks, stride=st, dilation=dl,
                             padding=mode, **kw))
        ref = _reference(x, ks, st, dl, mode)
        return (out.shape == expect_shape) and bool(jnp.allclose(out, ref))

    # General path (pad H and W): (2,4,15,17) -> (2,4,16,32), both modes.
    x = jax.random.normal(jax.random.PRNGKey(0), (2, 4, 15, 17), dtype=jnp.float32)
    for mode in ("corner", "same"):
        ok &= check(x, 16, 16, 1, mode, (2, 4, 16, 32))

    # b=1: the flattened B*C axis drives the grid.
    x1 = jax.random.normal(jax.random.PRNGKey(2), (1, 6, 15, 17), dtype=jnp.float32)
    ok &= check(x1, 16, 16, 1, "corner", (1, 6, 16, 32))

    # Lane-dense flat path (pad_w == 0): (2,4,14,32) -> (2,4,16,32), both modes.
    x2 = jax.random.normal(jax.random.PRNGKey(3), (2, 4, 14, 32), dtype=jnp.float32)
    for mode in ("corner", "same"):
        ok &= check(x2, 16, 16, 1, mode, (2, 4, 16, 32))

    # Oversized-plane branch (forced via tiny budget) -> XLA pad fallback.
    ok &= check(x, 16, 16, 1, "corner", (2, 4, 16, 32), tile_budget_bytes=256)

    # Already aligned: no-pad fast path.
    x3 = jax.random.normal(jax.random.PRNGKey(1), (2, 4, 16, 32), dtype=jnp.float32)
    out3 = jax.block_until_ready(
        adaptive_padding(x3, kernel_size=16, stride=16, dilation=1, padding="corner"))
    ok &= (out3.shape == x3.shape) and bool(jnp.allclose(out3, x3))

    print("KERNEL_OK" if ok else "KERNEL_MISMATCH")
</pallas_src>

<mosaic_0001>
module attributes {stable_mosaic.version = 11 : i64} {
  func.func @_pad_plane_kernel(%arg0: i32, %arg1: memref<4x15x17xf32, #tpu.memory_space<vmem>>, %arg2: memref<4x16x32xf32, #tpu.memory_space<vmem>>) attributes {dimension_semantics = [#tpu.dimension_semantics<parallel>], iteration_bounds = array<i64: 2>, scalar_prefetch = 0 : i64, scratch_operands = 0 : i64, tpu.core_type = #tpu.core_type<tc>, window_params = [{transform_indices = @transform_0, window_bounds = array<i64: 4, 15, 17>}, {transform_indices = @transform_1, window_bounds = array<i64: 4, 16, 32>}]} {
    %c0 = arith.constant 0 : index
    %c0_0 = arith.constant 0 : index
    %c0_1 = arith.constant 0 : index
    %0 = vector.load %arg1[%c0, %c0_0, %c0_1] : memref<4x15x17xf32, #tpu.memory_space<vmem>>, vector<4x15x17xf32>
    %c0_2 = arith.constant 0 : index
    %c0_3 = arith.constant 0 : index
    %c0_4 = arith.constant 0 : index
    %1 = vector.load %arg2[%c0_2, %c0_3, %c0_4] : memref<4x16x32xf32, #tpu.memory_space<vmem>>, vector<4x15x17xf32>
    tpu.vector_store %arg2[%c0_2, %c0_3, %c0_4], %0 {strides = array<i32>} : memref<4x16x32xf32, #tpu.memory_space<vmem>>, vector<4x15x17xf32>,
    %cst = arith.constant 0.000000e+00 : f32
    %2 = vector.broadcast %cst : f32 to vector<4x1x32xf32>
    %c0_5 = arith.constant 0 : index
    %c15 = arith.constant 15 : index
    %c0_6 = arith.constant 0 : index
    %3 = vector.load %arg2[%c0_5, %c15, %c0_6] : memref<4x16x32xf32, #tpu.memory_space<vmem>>, vector<4x1x32xf32>
    tpu.vector_store %arg2[%c0_5, %c15, %c0_6], %2 {strides = array<i32>} : memref<4x16x32xf32, #tpu.memory_space<vmem>>, vector<4x1x32xf32>,
    %cst_7 = arith.constant 0.000000e+00 : f32
    %4 = vector.broadcast %cst_7 : f32 to vector<4x15x15xf32>
    %c0_8 = arith.constant 0 : index
    %c0_9 = arith.constant 0 : index
    %c17 = arith.constant 17 : index
    %5 = vector.load %arg2[%c0_8, %c0_9, %c17] : memref<4x16x32xf32, #tpu.memory_space<vmem>>, vector<4x15x15xf32>
    tpu.vector_store %arg2[%c0_8, %c0_9, %c17], %4 {strides = array<i32>} : memref<4x16x32xf32, #tpu.memory_space<vmem>>, vector<4x15x15xf32>,
    return
  }
  func.func @transform_0(%arg0: i32) -> (i32, i32, i32) {
    %c0_i32 = arith.constant 0 : i32
    %c0_i32_0 = arith.constant 0 : i32
    %c0_i32_1 = arith.constant 0 : i32
    return %arg0, %c0_i32, %c0_i32_0 : i32, i32, i32
  }
  func.func @transform_1(%arg0: i32) -> (i32, i32, i32) {
    %c0_i32 = arith.constant 0 : i32
    %c0_i32_0 = arith.constant 0 : i32
    %c0_i32_1 = arith.constant 0 : i32
    return %arg0, %c0_i32, %c0_i32_0 : i32, i32, i32
  }
}

</mosaic_0001>

<llo_original>
// kernel: tpu_custom_call.1
$region0: #{tpu_custom_call.1}
  #allocation0 [shape = 'u32[]', space=smem, size = 0x4, offset = 0x4, fixed_abs, tag = 'smem constant byte address 0x4 - core index']
  #allocation1 [shape = 'u32[144,128]{1,0:T(1,128)}', space=vmem, size = 0x12000, scoped, tag = 'internal scratch']
  %s0 = inlined_call_operand.vmem [shape: f32[8,15,17], index: 0, kind: input, shape index: {}]
  %s1 = inlined_call_operand.hbm [shape: f32[8,16,32], index: 1, kind: output, shape index: {}]
  %s2 = sld [smem:[#allocation0]]
  $region37: #{tpu_custom_call.1} parent=0
    _
  %s4 = ssub.s32 1, %s2
  %s5 = scalar_select 0, %s4, %s2
  $region1: #{tpu_custom_call.1} parent=0
    #allocation2 [shape = 'u8[65536]{0}', space=vmem, size = 0x10000, scoped, tag = 'output window, operand 0']
    #allocation3 [shape = 's32[2]{0}', space=sflag, size = 0x8, scoped, tag = 'scoped memory for tpu_custom_call.1']
    %6 = vsyncpa [#allocation3], 0
    %s7 = scalar_lea.sflag [#allocation3], 1
    %8 = vsyncpa %s7, 0
    loop: start=0, step=1, limit=4
    $region2: #{tpu_custom_call.1} parent=1 // loop_pre_header
      _
    $region3: #{tpu_custom_call.1} parent=1 // loop_header
      %s10 = sphi 0, %s14
      %p11 = scmp.ge.s32.totalorder %s10, 4
      %s20 = sphi 0, %s22
      %s23 = sphi 0, %s20
      %s24 = sphi 0, %s23
      %s40 = sphi 0, %s24
      %s46 = sphi 0, %s48
      %s49 = sphi 0, %s46
      %s50 = sphi 0, %s49
      %s66 = sphi 0, %s50
    $region4: #{tpu_custom_call.1} parent=1 // loop_header_branch
      %13 = sbr.rel (%p11) target = $region8
    $region5: #{tpu_custom_call.1} parent=1 // loop_body
      %s15 = ssub.s32 %s10, 1
      %s16 = ssub.s32 %s10, 2
      %s17 = sadd.s32 %s10, 1
      %s18 = ssub.s32 %s10, %s17
      %p19 = scmp.eq.s32.totalorder %s18, 0
      %s21 = sadd.s32 %s20, 1
      %s22 = scalar_select %p19, %s20, %s21
      %p25 = pneg %p19
      %p26 = scmp.eq.s32.totalorder %s10, 1
      %p27 = por %p25, %p26
      %p28 = scmp.ne.s32.totalorder %s20, %s23
      %p29 = scmp.eq.s32.totalorder %s10, 0
      %p30 = por %p28, %p29
      %p31 = scmp.ne.s32.totalorder %s20, %s23
      %p32 = scmp.eq.s32.totalorder %s15, 1
      %p33 = por %p31, %p32
      %p34 = scmp.ne.s32.totalorder %s23, %s24
      %p35 = scmp.eq.s32.totalorder %s15, 0
      %p36 = por %p34, %p35
      %p37 = scmp.ne.s32.totalorder %s23, %s24
      %p38 = scmp.eq.s32.totalorder %s16, 1
      %p39 = por %p37, %p38
      %p41 = scmp.ne.s32.totalorder %s24, %s40
      %p42 = scmp.eq.s32.totalorder %s16, 0
      %p43 = por %p41, %p42
      %s44 = ssub.s32 %s10, %s17
      %p45 = scmp.eq.s32.totalorder %s44, 0
      %s47 = sadd.s32 %s46, 1
      %s48 = scalar_select %p45, %s46, %s47
      %p51 = pneg %p45
      %p52 = scmp.eq.s32.totalorder %s10, 1
      %p53 = por %p51, %p52
      %p54 = scmp.ne.s32.totalorder %s46, %s49
      %p55 = scmp.eq.s32.totalorder %s10, 0
      %p56 = por %p54, %p55
      %p57 = scmp.ne.s32.totalorder %s46, %s49
      %p58 = scmp.eq.s32.totalorder %s15, 1
      %p59 = por %p57, %p58
      %p60 = scmp.ne.s32.totalorder %s49, %s50
      %p61 = scmp.eq.s32.totalorder %s15, 0
      %p62 = por %p60, %p61
      %p63 = scmp.ne.s32.totalorder %s49, %s50
      %p64 = scmp.eq.s32.totalorder %s16, 1
      %p65 = por %p63, %p64
      %p67 = scmp.ne.s32.totalorder %s50, %s66
      %p68 = scmp.eq.s32.totalorder %s16, 0
      %p69 = por %p67, %p68
      %p70 = scmp.le.s32.totalorder 1, %s10
      %p71 = scmp.lt.s32.totalorder %s10, 3
      %p72 = pnand %p70, %p71
      %p73 = pneg %p72
      // Predicated region
      $region9: #{tpu_custom_call.1} parent=5 // pred_check
        _
      $region10: #{tpu_custom_call.1} parent=5 // pred_check_branch
        %75 = sbr.rel (%p72) target = $region12
      $region11: #{tpu_custom_call.1} parent=5 // pred_region
        %s76 = ssub.s32 %s10, 1
      $region12: #{tpu_custom_call.1} parent=5 // pred_fallthru
        _
      %p77 = scmp.lt.s32.totalorder %s10, 2
      // Predicated region
      $region13: #{tpu_custom_call.1} parent=5 // pred_check
        %p78 = pneg %p77
      $region14: #{tpu_custom_call.1} parent=5 // pred_check_branch
        %80 = sbr.rel (%p78) target = $region16
      $region15: #{tpu_custom_call.1} parent=5 // pred_region
        // Predicated region
        $region17: #{tpu_custom_call.1} parent=15 // pred_check
          %p81 = pneg %p30
        $region18: #{tpu_custom_call.1} parent=15 // pred_check_branch
          %83 = sbr.rel (%p81) target = $region20
        $region19: #{tpu_custom_call.1} parent=15 // pred_region
          %s84 = smul.u32 4, %s10
          %p85 = scmp.lt.s32.totalorder %s84, 7
          %s86 = scalar_select %p85, %s84, 7
          %s87 = smul.addr %s86, 2
          %s88 = smul.addr %s87, 8
          %s89 = scalar_lea.vmem %s0, %s88
          %s90 = smul.u32 4, %s10
        $region20: #{tpu_custom_call.1} parent=15 // pred_fallthru
          _
      $region16: #{tpu_custom_call.1} parent=5 // pred_fallthru
        _
      %p91 = scmp.le.s32.totalorder 1, %s10
      %p92 = scmp.lt.s32.totalorder %s10, 3
      %p93 = pnand %p91, %p92
      %p94 = pneg %p93
      // Predicated region
      $region21: #{tpu_custom_call.1} parent=5 // pred_check
        _
      $region22: #{tpu_custom_call.1} parent=5 // pred_check_branch
        %96 = sbr.rel (%p93) target = $region24
      $region23: #{tpu_custom_call.1} parent=5 // pred_region
        %s97 = ssub.s32 %s10, 1
        %s98 = smul.u32 4, %s15
        %p99 = scmp.lt.s32.totalorder %s98, 7
        %s100 = scalar_select %p99, %s98, 7
        %s101 = smul.addr %s100, 2
        %s102 = smul.addr %s101, 8
        %s103 = scalar_lea.vmem %s0, %s102
        %p104 = pneg %p36
        %p105 = pneg %p33
        %p106 = pneg %p62
        %p107 = pneg %p59
        %s108 = sand.u32 %s49, 1
        %s109 = scalar_lea.sflag [#allocation3], %s108
        %s110 = sand.u32 %s49, 1
        %s111 = smul.addr %s110, 64
        %s112 = scalar_lea.vmem [#allocation2], %s111
        %s113 = smul.u32 4, %s15
        %p114 = scmp.lt.s32.totalorder %s113, 7
        %s115 = scalar_select %p114, %s113, 7
        %s116 = smul.addr %s115, 2
        %s117 = smul.addr %s116, 8
        %s118 = scalar_lea.vmem %s0, %s117
        %s119 = smul.u32 4, %s15
        %s120 = smul.u32 4, %s15
        %v121 = vld [vmem:[%s118] sm:$0xff]
        %v122 = vld [vmem:[%s118 + $0x8] sm:$0x7f]
        %v123 = vld [vmem:[%s118 + $0x10] sm:$0xff]
        %v124 = vld [vmem:[%s118 + $0x18] sm:$0x7f]
        %v125 = vld [vmem:[%s118 + $0x20] sm:$0xff]
        %v126 = vld [vmem:[%s118 + $0x28] sm:$0x7f]
        %v127 = vld [vmem:[%s118 + $0x30] sm:$0xff]
        %v128 = vld [vmem:[%s118 + $0x38] sm:$0x7f]
        %vm129 = vcmask 138240
        %130 = vst.msk [vmem:[%s112] sm:$0xff] %vm129, %v121
        %vm131 = vcmask 137216
        %132 = vst.msk [vmem:[%s112 + $0x8] sm:$0x7f] %vm131, %v122
        %133 = vst.msk [vmem:[%s112 + $0x10] sm:$0xff] %vm129, %v123
        %134 = vst.msk [vmem:[%s112 + $0x18] sm:$0x7f] %vm131, %v124
        %135 = vst.msk [vmem:[%s112 + $0x20] sm:$0xff] %vm129, %v125
        %136 = vst.msk [vmem:[%s112 + $0x28] sm:$0x7f] %vm131, %v126
        %137 = vst.msk [vmem:[%s112 + $0x30] sm:$0xff] %vm129, %v127
        %138 = vst.msk [vmem:[%s112 + $0x38] sm:$0x7f] %vm131, %v128
        %vm139 = vcmask 253952
        %140 = vst.msk [vmem:[%s112 + $0xf] sm:$0x1] %vm139, 0.0
        %141 = vst.msk [vmem:[%s112 + $0x1f] sm:$0x1] %vm139, 0.0
        %142 = vst.msk [vmem:[%s112 + $0x2f] sm:$0x1] %vm139, 0.0
        %143 = vst.msk [vmem:[%s112 + $0x3f] sm:$0x1] %vm139, 0.0
        %vm144 = vcmask 261256
        %145 = vst.msk [vmem:[%s112] sm:$0xff] %vm144, 0.0
        %vm146 = vcmask 260232
        %147 = vst.msk [vmem:[%s112 + $0x8] sm:$0x7f] %vm146, 0.0
        %148 = vst.msk [vmem:[%s112 + $0x10] sm:$0xff] %vm144, 0.0
        %149 = vst.msk [vmem:[%s112 + $0x18] sm:$0x7f] %vm146, 0.0
        %150 = vst.msk [vmem:[%s112 + $0x20] sm:$0xff] %vm144, 0.0
        %151 = vst.msk [vmem:[%s112 + $0x28] sm:$0x7f] %vm146, 0.0
        %152 = vst.msk [vmem:[%s112 + $0x30] sm:$0xff] %vm144, 0.0
        %153 = vst.msk [vmem:[%s112 + $0x38] sm:$0x7f] %vm146, 0.0
        %s154 = sand.u32 %s49, 1
        %s155 = scalar_lea.sflag [#allocation3], %s154
        %s156 = sand.u32 %s49, 1
        %s157 = smul.addr %s156, 64
        %s158 = scalar_lea.vmem [#allocation2], %s157
        // Predicated region
        $region25: #{tpu_custom_call.1} parent=23 // pred_check
          %p159 = pneg %p59
        $region26: #{tpu_custom_call.1} parent=23 // pred_check_branch
          %161 = sbr.rel (%p159) target = $region28
        $region27: #{tpu_custom_call.1} parent=23 // pred_region
          %s162 = smul.u32 4, %s15
          %s164 = ssub.s32 1024, 1024
          %165 = vsyncadd %s155, %s164
          %s166 = smul.addr %s162, 2
          %s167 = smul.addr %s166, 128
          %s168 = scalar_lea.hbm %s1, %s167
          %s169 = sshll.u32 %s158, 4
          %s170 = int_to_ptr.vmem [resolvable:$true] %s169
          %175 = dma.vmem_to_hbm [thread:$0]  %s170, 1024, %s168, %s155, 128, 128, 8
        $region28: #{tpu_custom_call.1} parent=23 // pred_fallthru
          _
      $region24: #{tpu_custom_call.1} parent=5 // pred_fallthru
        _
      %p176 = scmp.le.s32.totalorder 2, %s10
      // Predicated region
      $region29: #{tpu_custom_call.1} parent=5 // pred_check
        %p177 = pneg %p176
      $region30: #{tpu_custom_call.1} parent=5 // pred_check_branch
        %179 = sbr.rel (%p177) target = $region32
      $region31: #{tpu_custom_call.1} parent=5 // pred_region
        %s180 = ssub.s32 %s10, 2
        // Predicated region
        $region33: #{tpu_custom_call.1} parent=31 // pred_check
          %p181 = pneg %p65
        $region34: #{tpu_custom_call.1} parent=31 // pred_check_branch
          %183 = sbr.rel (%p181) target = $region36
        $region35: #{tpu_custom_call.1} parent=31 // pred_region
          %s184 = sand.u32 %s50, 1
          %s185 = scalar_lea.sflag [#allocation3], %s184
          %s186 = sand.u32 %s50, 1
          %s187 = smul.addr %s186, 64
          %s188 = scalar_lea.vmem [#allocation2], %s187
          %189 = dma.done %s185, 1024
        $region36: #{tpu_custom_call.1} parent=31 // pred_fallthru
          _
      $region32: #{tpu_custom_call.1} parent=5 // pred_fallthru
        _
    $region6: #{tpu_custom_call.1} parent=1 // loop_footer
      %s14 = sadd.s32 1, %s10
    $region7: #{tpu_custom_call.1} parent=1 // loop_footer_branch
      %9 = sbr.rel target = $region3
    $region8: #{tpu_custom_call.1} parent=1 // loop_exit
      _
    %190 = vsyncpa [#allocation3], 1
    %s191 = scalar_lea.sflag [#allocation3], 1
    %192 = vsyncpa %s191, 1

</llo_original>
